<compile_context>
chip_gen: v6e
topology: v6e:2x2x1
jax: 0.10.0
libtpu: 0.0.40
codegen_flags: <defaults>
</compile_context>

<pallas_src>
import jax
import jax.numpy as jnp
from jax.experimental import pallas as pl
from jax.experimental.pallas import tpu as pltpu

_NEG_INF = -1e30  # padded-logit bias; exp(-1e30 - m) underflows to exactly 0 (f32)


def _round_up(n, m):
    return ((n + m - 1) // m) * m


def _tpu_budgets():
    """Generation-aware (x double-buffer window, vmem_limit cap, force>=2 steps)."""
    vmem_phys = 64 * 1024 * 1024           # conservative default (v7x)
    try:
        vmem_phys = int(pltpu.get_tpu_info().vmem_capacity_bytes)
    except Exception:
        pass
    if vmem_phys >= 100 * 1024 * 1024:     # v5e / v6e: 128 MiB VMEM, 1 TensorCore
        return 48 * 1024 * 1024, 100 * 1024 * 1024, False
    # v7x: 64 MiB VMEM per TC, 2 TCs -> keep headroom and want >=2 parallel steps
    return 24 * 1024 * 1024, 56 * 1024 * 1024, True


def _mlp_softmax_kernel(x_ref, w1_ref, b1_ref, w2_ref, b2_ref, o_ref):
    # x arrives in its native dtype; cast to the MXU compute dtype in-kernel
    # (VPU slot, hidden under the x DMA).
    x = x_ref[...].astype(w1_ref.dtype)

    # hidden = relu(x @ W1 + b1)   (f32 accumulation on the MXU)
    h = jnp.dot(x, w1_ref[...], preferred_element_type=jnp.float32)
    h = jnp.maximum(h + b1_ref[...], 0.0)               # (TB, HP) + (1, HP)

    # logits = hidden @ W2 + b2
    logits = jnp.dot(h.astype(w2_ref.dtype), w2_ref[...],
                     preferred_element_type=jnp.float32)
    logits = logits + b2_ref[...]                        # padded lanes carry -1e30

    # numerically stable softmax over the (padded, lane-dense) class axis
    m = jnp.max(logits, axis=1, keepdims=True)
    e = jnp.exp(logits - m)                              # padded lanes -> exactly 0
    denom = jnp.sum(e, axis=1, keepdims=True)
    o_ref[...] = (e * pl.reciprocal(denom, approx=True)).astype(o_ref.dtype)


def prepare_params(w1, b1, w2, b2, compute_dtype=jnp.bfloat16):
    """Pad + cast parameters ONCE (hoisted out of the per-call forward path).

    w1: (K, H), b1: (H,) or (1, H), w2: (H, O), b2: (O,) or (1, O).
    Hidden/output dims are lane-padded to multiples of 128; padded W2 class
    lanes get a -1e30 bias so their softmax contribution is exactly 0.
    """
    K, H = w1.shape
    O = w2.shape[1]
    HP = _round_up(H, 128)
    OP = _round_up(O, 128)

    w1p = jnp.zeros((K, HP), compute_dtype).at[:, :H].set(w1.astype(compute_dtype))
    b1p = jnp.zeros((1, HP), jnp.float32).at[:, :H].set(
        jnp.reshape(b1, (1, H)).astype(jnp.float32))
    w2p = jnp.zeros((HP, OP), compute_dtype).at[:H, :O].set(w2.astype(compute_dtype))
    # b2p MUST stay f32: -1e30 would overflow to -inf in bf16.
    b2p = jnp.full((1, OP), _NEG_INF, jnp.float32).at[:, :O].set(
        jnp.reshape(b2, (1, O)).astype(jnp.float32))
    return {"w1p": w1p, "b1p": b1p, "w2p": w2p, "b2p": b2p,
            "hidden_dim": H, "output_dim": O}


def linear_classifier_forward(x, params, *, max_batch_tile=1024):
    """x: (B, input_dim); params: output of prepare_params().
    Returns (B, output_dim) softmax probabilities in x.dtype."""
    w1p, b1p, w2p, b2p = params["w1p"], params["b1p"], params["w2p"], params["b2p"]
    O = params["output_dim"]
    B, K = x.shape
    Kw, HP = w1p.shape
    OP = w2p.shape[1]
    assert Kw == K, "x feature dim does not match prepared W1"

    compute_dtype = w1p.dtype
    out_dtype = compute_dtype          # lane-dense slab writeback dtype

    x_window, vmem_cap, force_two_steps = _tpu_budgets()

    x_item = jnp.dtype(x.dtype).itemsize
    w_item = jnp.dtype(compute_dtype).itemsize
    o_item = jnp.dtype(out_dtype).itemsize
    # sublane alignment: 16 when any packed (sub-32-bit) dtype is involved
    align = 16 if min(x_item, w_item, o_item) < 4 else 8

    # --- batch tile: largest tile whose double-buffered x window fits budget ---
    bytes_per_row = K * x_item
    tb_cap = max(align, x_window // (2 * bytes_per_row))
    TB = int(min(B, max_batch_tile, tb_cap))
    if TB < B:
        TB = max(align, (TB // align) * align)           # keep loads/stores unmasked
    if force_two_steps and B >= 2 * align:               # v7x: use both TensorCores
        TB = min(TB, _round_up(pl.cdiv(B, 2), align))
    TB = int(min(TB, B))
    grid = (pl.cdiv(B, TB),)

    # --- cost estimate (lets XLA overlap surrounding ops with the kernel) ------
    flops = 2 * B * K * HP + 2 * B * HP * OP
    bytes_accessed = (B * K * x_item + (K * HP + HP * OP) * w_item
                      + (HP + OP) * 4 + B * OP * o_item)
    cost = pl.CostEstimate(flops=int(flops), transcendentals=int(B * OP),
                           bytes_accessed=int(bytes_accessed))

    def run(single_buffer_weights):
        if single_buffer_weights:
            # Constant-index operands: no benefit from double-buffering.
            def resident(shape):
                return pl.BlockSpec(shape, lambda i: (0, 0),
                                    pipeline_mode=pl.Buffered(1))
        else:
            def resident(shape):
                return pl.BlockSpec(shape, lambda i: (0, 0))

        weight_bufs = 1 if single_buffer_weights else 2
        vmem_bytes = int(
            2 * TB * K * x_item                                       # x dbl buffer
            + 2 * TB * OP * o_item                                    # out dbl buffer
            + weight_bufs * ((K * HP + HP * OP) * w_item + (HP + OP) * 4)
            + 6 * TB * HP * 4                                         # f32 temps
            + (2 << 20))                                              # slack
        vmem_bytes = int(min(max(vmem_bytes, 16 * 1024 * 1024), vmem_cap))

        return pl.pallas_call(
            _mlp_softmax_kernel,
            out_shape=jax.ShapeDtypeStruct((B, OP), out_dtype),
            grid=grid,
            in_specs=[
                pl.BlockSpec((TB, K), lambda i: (i, 0)),   # x tile (pipelined, native dtype)
                resident((K, HP)),                         # W1 (VMEM-resident)
                resident((1, HP)),                         # b1
                resident((HP, OP)),                        # W2
                resident((1, OP)),                         # b2 (f32, -1e30 padded)
            ],
            out_specs=pl.BlockSpec((TB, OP), lambda i: (i, 0)),
            compiler_params=pltpu.CompilerParams(
                dimension_semantics=("parallel",),
                vmem_limit_bytes=vmem_bytes),
            cost_estimate=cost,
        )(x, w1p, b1p, w2p, b2p)

    try:
        out_padded = run(True)
    except Exception:
        # pl.Buffered(1) unsupported in this jax version -> default buffering.
        out_padded = run(False)

    # slice away the padded class lanes; lane-dense store already happened in-kernel
    return out_padded[:, :O].astype(x.dtype)


def init_params(key, input_dim, hidden_dim=10, output_dim=2, dtype=jnp.float32):
    # Matches the PyTorch module __init__ with w_0=None:
    #   weights zero-initialized, biases at PyTorch default uniform(-1/sqrt(fan_in), ...)
    k1, k2 = jax.random.split(key)
    w1 = jnp.zeros((input_dim, hidden_dim), dtype=dtype)
    w2 = jnp.zeros((hidden_dim, output_dim), dtype=dtype)
    bound1 = 1.0 / (input_dim ** 0.5)
    bound2 = 1.0 / (hidden_dim ** 0.5)
    b1 = jax.random.uniform(k1, (hidden_dim,), dtype, -bound1, bound1)
    b2 = jax.random.uniform(k2, (output_dim,), dtype, -bound2, bound2)
    return w1, b1, w2, b2


def _ref_forward(x, w1, b1, w2, b2):
    h = jnp.maximum(x @ w1 + b1.reshape(1, -1), 0.0)
    return jax.nn.softmax(h @ w2 + b2.reshape(1, -1), axis=1)


if __name__ == "__main__":
    key = jax.random.PRNGKey(0)
    kx, kp, kw1, kw2 = jax.random.split(key, 4)

    B, input_dim, hidden_dim, output_dim = 8, 32, 10, 2
    x = jax.random.normal(kx, (B, input_dim), dtype=jnp.float32)

    # --- case 1: PyTorch init semantics (zero weights), f32 MXU path ----------
    w1, b1, w2, b2 = init_params(kp, input_dim, hidden_dim, output_dim)
    params_f32 = prepare_params(w1, b1, w2, b2, compute_dtype=jnp.float32)
    out = jax.block_until_ready(linear_classifier_forward(x, params_f32))
    ref = _ref_forward(x, w1, b1, w2, b2)
    assert out.shape == (B, output_dim)
    assert jnp.allclose(out, ref, atol=2e-3), "zero-weight f32 path mismatch"

    # --- case 2: nonzero weights, bf16 MXU inputs / f32 accumulate (default) --
    w1n = 0.1 * jax.random.normal(kw1, (input_dim, hidden_dim), dtype=jnp.float32)
    w2n = 0.1 * jax.random.normal(kw2, (hidden_dim, output_dim), dtype=jnp.float32)
    params_bf16 = prepare_params(w1n, b1, w2n, b2, compute_dtype=jnp.bfloat16)
    out_bf16 = jax.block_until_ready(linear_classifier_forward(x, params_bf16))
    ref_n = _ref_forward(x, w1n, b1, w2n, b2)
    assert out_bf16.shape == (B, output_dim)
    assert jnp.allclose(out_bf16, ref_n, atol=2e-2), "nonzero-weight bf16 path mismatch"

    print("KERNEL_OK")
</pallas_src>

<mosaic_0001>
module attributes {stable_mosaic.version = 11 : i64} {
  func.func @_mlp_softmax_kernel(%arg0: i32, %arg1: memref<8x32xf32, #tpu.memory_space<vmem>>, %arg2: memref<32x128xf32, #tpu.memory_space<vmem>>, %arg3: memref<1x128xf32, #tpu.memory_space<vmem>>, %arg4: memref<128x128xf32, #tpu.memory_space<vmem>>, %arg5: memref<1x128xf32, #tpu.memory_space<vmem>>, %arg6: memref<8x128xf32, #tpu.memory_space<vmem>>) attributes {dimension_semantics = [#tpu.dimension_semantics<parallel>], iteration_bounds = array<i64: 1>, scalar_prefetch = 0 : i64, scratch_operands = 0 : i64, tpu.core_type = #tpu.core_type<tc>, window_params = [{transform_indices = @transform_0, window_bounds = array<i64: 8, 32>}, {pipeline_mode = #tpu.pipeline_mode<synchronous>, transform_indices = @transform_1, window_bounds = array<i64: 32, 128>}, {pipeline_mode = #tpu.pipeline_mode<synchronous>, transform_indices = @transform_2, window_bounds = array<i64: 1, 128>}, {pipeline_mode = #tpu.pipeline_mode<synchronous>, transform_indices = @transform_3, window_bounds = array<i64: 128, 128>}, {pipeline_mode = #tpu.pipeline_mode<synchronous>, transform_indices = @transform_4, window_bounds = array<i64: 1, 128>}, {transform_indices = @transform_5, window_bounds = array<i64: 8, 128>}]} {
    %c0 = arith.constant 0 : index
    %c0_0 = arith.constant 0 : index
    %0 = vector.load %arg1[%c0, %c0_0] : memref<8x32xf32, #tpu.memory_space<vmem>>, vector<8x32xf32>
    %c0_1 = arith.constant 0 : index
    %c0_2 = arith.constant 0 : index
    %1 = vector.load %arg2[%c0_1, %c0_2] : memref<32x128xf32, #tpu.memory_space<vmem>>, vector<32x128xf32>
    %cst = arith.constant dense<0.000000e+00> : vector<8x128xf32>
    %2 = tpu.matmul %0, %1, %cst {dimension_numbers = #tpu.dot_dimension_numbers<[1], [0], [0], [1], [0, 0, 1, 1], [], []>} : vector<8x32xf32>, vector<32x128xf32>, vector<8x128xf32> -> vector<8x128xf32>
    %c0_3 = arith.constant 0 : index
    %c0_4 = arith.constant 0 : index
    %3 = vector.load %arg3[%c0_3, %c0_4] : memref<1x128xf32, #tpu.memory_space<vmem>>, vector<1x128xf32>
    %4 = vector.broadcast %3 : vector<1x128xf32> to vector<8x128xf32>
    %5 = arith.addf %2, %4 : vector<8x128xf32>
    %cst_5 = arith.constant 0.000000e+00 : f32
    %6 = vector.broadcast %cst_5 : f32 to vector<8x128xf32>
    %7 = arith.maximumf %5, %6 : vector<8x128xf32>
    %c0_6 = arith.constant 0 : index
    %c0_7 = arith.constant 0 : index
    %8 = vector.load %arg4[%c0_6, %c0_7] : memref<128x128xf32, #tpu.memory_space<vmem>>, vector<128x128xf32>
    %cst_8 = arith.constant dense<0.000000e+00> : vector<8x128xf32>
    %9 = tpu.matmul %7, %8, %cst_8 {dimension_numbers = #tpu.dot_dimension_numbers<[1], [0], [0], [1], [0, 0, 1, 1], [], []>} : vector<8x128xf32>, vector<128x128xf32>, vector<8x128xf32> -> vector<8x128xf32>
    %c0_9 = arith.constant 0 : index
    %c0_10 = arith.constant 0 : index
    %10 = vector.load %arg5[%c0_9, %c0_10] : memref<1x128xf32, #tpu.memory_space<vmem>>, vector<1x128xf32>
    %11 = vector.broadcast %10 : vector<1x128xf32> to vector<8x128xf32>
    %12 = arith.addf %9, %11 : vector<8x128xf32>
    %cst_11 = arith.constant dense<0xFF800000> : vector<8xf32>
    %13 = vector.multi_reduction <maximumf>, %12, %cst_11 [1] : vector<8x128xf32> to vector<8xf32>
    %14 = vector.shape_cast %13 : vector<8xf32> to vector<8x1xf32>
    %15 = vector.broadcast %14 : vector<8x1xf32> to vector<8x128xf32>
    %16 = arith.subf %12, %15 : vector<8x128xf32>
    %17 = math.exp %16 : vector<8x128xf32>
    %cst_12 = arith.constant dense<0.000000e+00> : vector<8xf32>
    %18 = vector.multi_reduction <add>, %17, %cst_12 [1] : vector<8x128xf32> to vector<8xf32>
    %19 = vector.shape_cast %18 : vector<8xf32> to vector<8x1xf32>
    %20 = tpu.reciprocal %19 {approx = true} : vector<8x1xf32> -> vector<8x1xf32>
    %21 = vector.broadcast %20 : vector<8x1xf32> to vector<8x128xf32>
    %22 = arith.mulf %17, %21 : vector<8x128xf32>
    %c0_13 = arith.constant 0 : index
    %c0_14 = arith.constant 0 : index
    %23 = vector.load %arg6[%c0_13, %c0_14] : memref<8x128xf32, #tpu.memory_space<vmem>>, vector<8x128xf32>
    tpu.vector_store %arg6[%c0_13, %c0_14], %22 {strides = array<i32>} : memref<8x128xf32, #tpu.memory_space<vmem>>, vector<8x128xf32>,
    return
  }
  func.func @transform_0(%arg0: i32) -> (i32, i32) {
    %c0_i32 = arith.constant 0 : i32
    %c0_i32_0 = arith.constant 0 : i32
    return %arg0, %c0_i32 : i32, i32
  }
  func.func @transform_1(%arg0: i32) -> (i32, i32) {
    %c0_i32 = arith.constant 0 : i32
    %c0_i32_0 = arith.constant 0 : i32
    %c0_i32_1 = arith.constant 0 : i32
    return %c0_i32, %c0_i32_0 : i32, i32
  }
  func.func @transform_2(%arg0: i32) -> (i32, i32) {
    %c0_i32 = arith.constant 0 : i32
    %c0_i32_0 = arith.constant 0 : i32
    %c0_i32_1 = arith.constant 0 : i32
    return %c0_i32, %c0_i32_0 : i32, i32
  }
  func.func @transform_3(%arg0: i32) -> (i32, i32) {
    %c0_i32 = arith.constant 0 : i32
    %c0_i32_0 = arith.constant 0 : i32
    %c0_i32_1 = arith.constant 0 : i32
    return %c0_i32, %c0_i32_0 : i32, i32
  }
  func.func @transform_4(%arg0: i32) -> (i32, i32) {
    %c0_i32 = arith.constant 0 : i32
    %c0_i32_0 = arith.constant 0 : i32
    %c0_i32_1 = arith.constant 0 : i32
    return %c0_i32, %c0_i32_0 : i32, i32
  }
  func.func @transform_5(%arg0: i32) -> (i32, i32) {
    %c0_i32 = arith.constant 0 : i32
    %c0_i32_0 = arith.constant 0 : i32
    return %arg0, %c0_i32 : i32, i32
  }
}

module attributes {stable_mosaic.version = 11 : i64} {
  func.func @_mlp_softmax_kernel(%arg0: i32, %arg1: memref<8x32xf32, #tpu.memory_space<vmem>>, %arg2: memref<32x128xf32, #tpu.memory_space<vmem>>, %arg3: memref<1x128xf32, #tpu.memory_space<vmem>>, %arg4: memref<128x128xf32, #tpu.memory_space<vmem>>, %arg5: memref<1x128xf32, #tpu.memory_space<vmem>>, %arg6: memref<8x128xf32, #tpu.memory_space<vmem>>) attributes {dimension_semantics = [#tpu.dimension_semantics<parallel>], iteration_bounds = array<i64: 1>, scalar_prefetch = 0 : i64, scratch_operands = 0 : i64, tpu.core_type = #tpu.core_type<tc>, window_params = [{transform_indices = @transform_0, window_bounds = array<i64: 8, 32>}, {pipeline_mode = #tpu.pipeline_mode<synchronous>, transform_indices = @transform_1, window_bounds = array<i64: 32, 128>}, {pipeline_mode = #tpu.pipeline_mode<synchronous>, transform_indices = @transform_2, window_bounds = array<i64: 1, 128>}, {pipeline_mode = #tpu.pipeline_mode<synchronous>, transform_indices = @transform_3, window_bounds = array<i64: 128, 128>}, {pipeline_mode = #tpu.pipeline_mode<synchronous>, transform_indices = @transform_4, window_bounds = array<i64: 1, 128>}, {transform_indices = @transform_5, window_bounds = array<i64: 8, 128>}]} {
    %c0 = arith.constant 0 : index
    %c0_0 = arith.constant 0 : index
    %0 = vector.load %arg1[%c0, %c0_0] : memref<8x32xf32, #tpu.memory_space<vmem>>, vector<8x32xf32>
    %c0_1 = arith.constant 0 : index
    %c0_2 = arith.constant 0 : index
    %1 = vector.load %arg2[%c0_1, %c0_2] : memref<32x128xf32, #tpu.memory_space<vmem>>, vector<32x128xf32>
    %cst = arith.constant dense<0.000000e+00> : vector<8x128xf32>
    %2 = tpu.matmul %0, %1, %cst {dimension_numbers = #tpu.dot_dimension_numbers<[1], [0], [0], [1], [0, 0, 1, 1], [], []>} : vector<8x32xf32>, vector<32x128xf32>, vector<8x128xf32> -> vector<8x128xf32>
    %c0_3 = arith.constant 0 : index
    %c0_4 = arith.constant 0 : index
    %3 = vector.load %arg3[%c0_3, %c0_4] : memref<1x128xf32, #tpu.memory_space<vmem>>, vector<1x128xf32>
    %4 = vector.broadcast %3 : vector<1x128xf32> to vector<8x128xf32>
    %5 = arith.addf %2, %4 : vector<8x128xf32>
    %cst_5 = arith.constant 0.000000e+00 : f32
    %6 = vector.broadcast %cst_5 : f32 to vector<8x128xf32>
    %7 = arith.maximumf %5, %6 : vector<8x128xf32>
    %c0_6 = arith.constant 0 : index
    %c0_7 = arith.constant 0 : index
    %8 = vector.load %arg4[%c0_6, %c0_7] : memref<128x128xf32, #tpu.memory_space<vmem>>, vector<128x128xf32>
    %cst_8 = arith.constant dense<0.000000e+00> : vector<8x128xf32>
    %9 = tpu.matmul %7, %8, %cst_8 {dimension_numbers = #tpu.dot_dimension_numbers<[1], [0], [0], [1], [0, 0, 1, 1], [], []>} : vector<8x128xf32>, vector<128x128xf32>, vector<8x128xf32> -> vector<8x128xf32>
    %c0_9 = arith.constant 0 : index
    %c0_10 = arith.constant 0 : index
    %10 = vector.load %arg5[%c0_9, %c0_10] : memref<1x128xf32, #tpu.memory_space<vmem>>, vector<1x128xf32>
    %11 = vector.broadcast %10 : vector<1x128xf32> to vector<8x128xf32>
    %12 = arith.addf %9, %11 : vector<8x128xf32>
    %cst_11 = arith.constant dense<0xFF800000> : vector<8xf32>
    %13 = vector.multi_reduction <maximumf>, %12, %cst_11 [1] : vector<8x128xf32> to vector<8xf32>
    %14 = vector.shape_cast %13 : vector<8xf32> to vector<8x1xf32>
    %15 = vector.broadcast %14 : vector<8x1xf32> to vector<8x128xf32>
    %16 = arith.subf %12, %15 : vector<8x128xf32>
    %17 = math.exp %16 : vector<8x128xf32>
    %cst_12 = arith.constant dense<0.000000e+00> : vector<8xf32>
    %18 = vector.multi_reduction <add>, %17, %cst_12 [1] : vector<8x128xf32> to vector<8xf32>
    %19 = vector.shape_cast %18 : vector<8xf32> to vector<8x1xf32>
    %20 = tpu.reciprocal %19 {approx = true} : vector<8x1xf32> -> vector<8x1xf32>
    %21 = vector.broadcast %20 : vector<8x1xf32> to vector<8x128xf32>
    %22 = arith.mulf %17, %21 : vector<8x128xf32>
    %c0_13 = arith.constant 0 : index
    %c0_14 = arith.constant 0 : index
    %23 = vector.load %arg6[%c0_13, %c0_14] : memref<8x128xf32, #tpu.memory_space<vmem>>, vector<8x128xf32>
    tpu.vector_store %arg6[%c0_13, %c0_14], %22 {strides = array<i32>} : memref<8x128xf32, #tpu.memory_space<vmem>>, vector<8x128xf32>,
    return
  }
  func.func @transform_0(%arg0: i32) -> (i32, i32) {
    %c0_i32 = arith.constant 0 : i32
    %c0_i32_0 = arith.constant 0 : i32
    return %arg0, %c0_i32 : i32, i32
  }
  func.func @transform_1(%arg0: i32) -> (i32, i32) {
    %c0_i32 = arith.constant 0 : i32
    %c0_i32_0 = arith.constant 0 : i32
    %c0_i32_1 = arith.constant 0 : i32
    return %c0_i32, %c0_i32_0 : i32, i32
  }
  func.func @transform_2(%arg0: i32) -> (i32, i32) {
    %c0_i32 = arith.constant 0 : i32
    %c0_i32_0 = arith.constant 0 : i32
    %c0_i32_1 = arith.constant 0 : i32
    return %c0_i32, %c0_i32_0 : i32, i32
  }
  func.func @transform_3(%arg0: i32) -> (i32, i32) {
    %c0_i32 = arith.constant 0 : i32
    %c0_i32_0 = arith.constant 0 : i32
    %c0_i32_1 = arith.constant 0 : i32
    return %c0_i32, %c0_i32_0 : i32, i32
  }
  func.func @transform_4(%arg0: i32) -> (i32, i32) {
    %c0_i32 = arith.constant 0 : i32
    %c0_i32_0 = arith.constant 0 : i32
    %c0_i32_1 = arith.constant 0 : i32
    return %c0_i32, %c0_i32_0 : i32, i32
  }
  func.func @transform_5(%arg0: i32) -> (i32, i32) {
    %c0_i32 = arith.constant 0 : i32
    %c0_i32_0 = arith.constant 0 : i32
    return %arg0, %c0_i32 : i32, i32
  }
}

</mosaic_0001>

<llo_original>
// kernel: tpu_custom_call.1
$region0: #{tpu_custom_call.1}
  #allocation0 [shape = 'u32[]', space=smem, size = 0x4, offset = 0x4, fixed_abs, tag = 'smem constant byte address 0x4 - core index']
  #allocation1 [shape = 'u32[144,128]{1,0:T(1,128)}', space=vmem, size = 0x12000, scoped, tag = 'internal scratch']
  %s0 = inlined_call_operand.hbm [shape: f32[8,32], index: 0, kind: input, shape index: {}]
  %s1 = inlined_call_operand.hbm [shape: f32[32,128], index: 1, kind: input, shape index: {}]
  %s2 = inlined_call_operand.vmem [shape: f32[1,128], index: 2, kind: input, shape index: {}]
  %s3 = inlined_call_operand.hbm [shape: f32[128,128], index: 3, kind: input, shape index: {}]
  %s4 = inlined_call_operand.vmem [shape: f32[1,128], index: 4, kind: input, shape index: {}]
  %s5 = inlined_call_operand.hbm [shape: f32[8,128], index: 5, kind: output, shape index: {}]
  %s6 = sld [smem:[#allocation0]]
  $region42: #{tpu_custom_call.1} parent=0
    _
  %s8 = ssub.s32 1, %s6
  %s9 = scalar_select 0, %s8, %s6
  $region1: #{tpu_custom_call.1} parent=0
    #allocation2 [shape = 'u8[4096]{0}', space=vmem, size = 0x1000, scoped, tag = 'input window, operand 0, single buffered']
    #allocation3 [shape = 's32[1]{0}', space=sflag, size = 0x4, scoped, tag = 'scoped memory for tpu_custom_call.1']
    #allocation4 [shape = 's32[1]{0}', space=sflag, size = 0x4, scoped, tag = 'scoped memory for tpu_custom_call.1']
    #allocation5 [shape = 'u8[16384]{0}', space=vmem, size = 0x4000, scoped, tag = 'input window, operand 1, single buffered']
    #allocation6 [shape = 's32[1]{0}', space=sflag, size = 0x4, scoped, tag = 'scoped memory for tpu_custom_call.1']
    #allocation7 [shape = 'u8[65536]{0}', space=vmem, size = 0x10000, scoped, tag = 'input window, operand 3, single buffered']
    #allocation8 [shape = 'u8[4096]{0}', space=vmem, size = 0x1000, scoped, tag = 'output window, operand 0, single buffered']
    %10 = vsyncpa [#allocation3], 0
    %11 = vsyncpa [#allocation6], 0
    %12 = vsyncpa [#allocation4], 0
    // Predicated region
    $region2: #{tpu_custom_call.1} parent=1 // pred_check
      _
    $region3: #{tpu_custom_call.1} parent=1 // pred_check_branch
      %14 = sbr.rel (0) target = $region5
    $region4: #{tpu_custom_call.1} parent=1 // pred_region
      %s16 = ssub.s32 128, 128
      %17 = vsyncadd [#allocation3], %s16
      %s19 = sshll.u32 [#allocation2], 4
      %s20 = int_to_ptr.vmem [resolvable:$true] %s19
      %22 = dma.hbm_to_vmem [thread:$0]  %s0, 128, %s20, [#allocation3]
    $region5: #{tpu_custom_call.1} parent=1 // pred_fallthru
      _
    // Predicated region
    $region6: #{tpu_custom_call.1} parent=1 // pred_check
      _
    $region7: #{tpu_custom_call.1} parent=1 // pred_check_branch
      %24 = sbr.rel (0) target = $region9
    $region8: #{tpu_custom_call.1} parent=1 // pred_region
      %s26 = ssub.s32 512, 512
      %27 = vsyncadd [#allocation6], %s26
      %s28 = sshll.u32 [#allocation5], 4
      %s29 = int_to_ptr.vmem [resolvable:$true] %s28
      %34 = dma.hbm_to_vmem [thread:$0]  %s1, 512, %s29, [#allocation6], 128, 128, 8
    $region9: #{tpu_custom_call.1} parent=1 // pred_fallthru
      _
    // Predicated region
    $region10: #{tpu_custom_call.1} parent=1 // pred_check
      _
    $region11: #{tpu_custom_call.1} parent=1 // pred_check_branch
      %36 = sbr.rel (0) target = $region13
    $region12: #{tpu_custom_call.1} parent=1 // pred_region
      _
    $region13: #{tpu_custom_call.1} parent=1 // pred_fallthru
      _
    // Predicated region
    $region14: #{tpu_custom_call.1} parent=1 // pred_check
      _
    $region15: #{tpu_custom_call.1} parent=1 // pred_check_branch
      %38 = sbr.rel (0) target = $region17
    $region16: #{tpu_custom_call.1} parent=1 // pred_region
      %s40 = ssub.s32 2048, 2048
      %41 = vsyncadd [#allocation6], %s40
      %s42 = sshll.u32 [#allocation7], 4
      %s43 = int_to_ptr.vmem [resolvable:$true] %s42
      %48 = dma.hbm_to_vmem [thread:$0]  %s3, 2048, %s43, [#allocation6], 128, 128, 8
    $region17: #{tpu_custom_call.1} parent=1 // pred_fallthru
      _
    // Predicated region
    $region18: #{tpu_custom_call.1} parent=1 // pred_check
      _
    $region19: #{tpu_custom_call.1} parent=1 // pred_check_branch
      %50 = sbr.rel (0) target = $region21
    $region20: #{tpu_custom_call.1} parent=1 // pred_region
      _
    $region21: #{tpu_custom_call.1} parent=1 // pred_fallthru
      _
    // Predicated region
    $region22: #{tpu_custom_call.1} parent=1 // pred_check
      _
    $region23: #{tpu_custom_call.1} parent=1 // pred_check_branch
      %52 = sbr.rel (0) target = $region25
    $region24: #{tpu_custom_call.1} parent=1 // pred_region
      %53 = dma.done [#allocation3], 128
    $region25: #{tpu_custom_call.1} parent=1 // pred_fallthru
      _
    // Predicated region
    $region26: #{tpu_custom_call.1} parent=1 // pred_check
      _
    $region27: #{tpu_custom_call.1} parent=1 // pred_check_branch
      %55 = sbr.rel (0) target = $region29
    $region28: #{tpu_custom_call.1} parent=1 // pred_region
      %56 = dma.done [#allocation6], 512
    $region29: #{tpu_custom_call.1} parent=1 // pred_fallthru
      _
    // Predicated region
    $region30: #{tpu_custom_call.1} parent=1 // pred_check
      _
    $region31: #{tpu_custom_call.1} parent=1 // pred_check_branch
      %58 = sbr.rel (0) target = $region33
    $region32: #{tpu_custom_call.1} parent=1 // pred_region
      %59 = dma.done [#allocation6], 2048
    $region33: #{tpu_custom_call.1} parent=1 // pred_fallthru
      _
    %v60 = vld [vmem:[#allocation2] sm:$0xff]
    %v61 = vld [vmem:[#allocation5] sm:$0xff]
    %v62 = vld [vmem:[#allocation5 + $0x8] sm:$0xff]
    %v63 = vld [vmem:[#allocation5 + $0x10] sm:$0xff]
    %v64 = vld [vmem:[#allocation5 + $0x18] sm:$0xff]
    %v65 = vld [vmem:[%s2] sm:$0x1]
    %v67 = vlaneseq
    %v68 = vshrl.u32 %v67, 7
    %v69 = vsub.s32 0, %v68
    %v70 = vrot.slane %v65, %v69
    %vm72 = vcmask 261120
    %v74 = vsel %vm72, %v60, 0
    %76 = vmatprep.subr.mxu0 0.0
    %77 = vmatpush1.msra.mxu0 0.0
    %78 = vmatprep.subr.mxu0 0.0
    %79 = vmatpush1.msra.mxu0 0.0
    %80 = vmatprep.subr.mxu0 0.0
    %81 = vmatpush1.msra.mxu0 0.0
    %82 = vmatprep.subr.mxu0 0.0
    %83 = vmatpush1.msra.mxu0 0.0
    %84 = vmatprep.subr.mxu0 0.0
    %85 = vmatpush1.msra.mxu0 0.0
    %86 = vmatprep.subr.mxu0 0.0
    %87 = vmatpush1.msra.mxu0 0.0
    %88 = vmatprep.subr.mxu0 0.0
    %89 = vmatpush1.msra.mxu0 0.0
    %90 = vmatprep.subr.mxu0 0.0
    %91 = vmatpush1.msra.mxu0 0.0
    %92 = vmatprep.subr.mxu0 0.0
    %93 = vmatpush1.msra.mxu0 0.0
    %94 = vmatprep.subr.mxu0 0.0
    %95 = vmatpush1.msra.mxu0 0.0
    %96 = vmatprep.subr.mxu0 0.0
    %97 = vmatpush1.msra.mxu0 0.0
    %98 = vmatprep.subr.mxu0 0.0
    %99 = vmatpush1.msra.mxu0 0.0
    %100 = vmatprep.subr.mxu0 0.0
    %101 = vmatpush1.msra.mxu0 %v64
    %102 = vmatprep.subr.mxu0 0.0
    %103 = vmatpush1.msra.mxu0 %v63
    %104 = vmatprep.subr.mxu0 0.0
    %105 = vmatpush1.msra.mxu0 %v62
    %106 = vmatprep.subr.mxu0 0.0
    %107 = vmatpush1.msra.mxu0 %v61
    %108 = vmatprep.subr.mxu0 0.0
    %109 = vmatpush2.msra.mxu0 0.0
    %110 = vmatprep.subr.mxu0 0.0
    %111 = vmatpush2.msra.mxu0 0.0
    %112 = vmatprep.subr.mxu0 0.0
    %113 = vmatpush2.msra.mxu0 0.0
    %114 = vmatprep.subr.mxu0 0.0
    %115 = vmatpush2.msra.mxu0 0.0
    %116 = vmatprep.subr.mxu0 0.0
    %117 = vmatpush2.msra.mxu0 0.0
    %118 = vmatprep.subr.mxu0 0.0
    %119 = vmatpush2.msra.mxu0 0.0
    %120 = vmatprep.subr.mxu0 0.0
    %121 = vmatpush2.msra.mxu0 0.0
    %122 = vmatprep.subr.mxu0 0.0
    %123 = vmatpush2.msra.mxu0 0.0
    %124 = vmatprep.subr.mxu0 0.0
    %125 = vmatpush2.msra.mxu0 0.0
    %126 = vmatprep.subr.mxu0 0.0
    %127 = vmatpush2.msra.mxu0 0.0
    %128 = vmatprep.subr.mxu0 0.0
    %129 = vmatpush2.msra.mxu0 0.0
    %130 = vmatprep.subr.mxu0 0.0
    %131 = vmatpush2.msra.mxu0 0.0
    %132 = vmatprep.subr.mxu0 0.0
    %133 = vmatpush2.msra.mxu0 0.0
    %134 = vmatprep.subr.mxu0 0.0
    %135 = vmatpush2.msra.mxu0 0.0
    %136 = vmatprep.subr.mxu0 0.0
    %137 = vmatpush2.msra.mxu0 0.0
    %138 = vmatprep.subr.mxu0 0.0
    %139 = vmatpush2.msra.mxu0 0.0
    %140 = vmatprep.mubr.f32.mxu0 0.0
    %141 = vmatmul.mubr.f32.gmra.mxu0 %v74
    %v142 = vpop.f32.mrf.mxu0
    %v143 = vadd.f32 %v70, %v142
    %v144 = vpop.f32.mrf.mxu0
    %145 = vdwg.mxu0
    %v146 = vmax.f32 %v143, 0.0
    %v147 = vld [vmem:[#allocation7] sm:$0xff]
    %v148 = vld [vmem:[#allocation7 + $0x8] sm:$0xff]
    %v149 = vld [vmem:[#allocation7 + $0x10] sm:$0xff]
    %v150 = vld [vmem:[#allocation7 + $0x18] sm:$0xff]
    %v151 = vld [vmem:[#allocation7 + $0x20] sm:$0xff]
    %v152 = vld [vmem:[#allocation7 + $0x28] sm:$0xff]
    %v153 = vld [vmem:[#allocation7 + $0x30] sm:$0xff]
    %v154 = vld [vmem:[#allocation7 + $0x38] sm:$0xff]
    %v155 = vld [vmem:[#allocation7 + $0x40] sm:$0xff]
    %v156 = vld [vmem:[#allocation7 + $0x48] sm:$0xff]
    %v157 = vld [vmem:[#allocation7 + $0x50] sm:$0xff]
    %v158 = vld [vmem:[#allocation7 + $0x58] sm:$0xff]
    %v159 = vld [vmem:[#allocation7 + $0x60] sm:$0xff]
    %v160 = vld [vmem:[#allocation7 + $0x68] sm:$0xff]
    %v161 = vld [vmem:[#allocation7 + $0x70] sm:$0xff]
    %v162 = vld [vmem:[#allocation7 + $0x78] sm:$0xff]
    %v163 = vld [vmem:[%s4] sm:$0x1]
    %v165 = vlaneseq
    %v166 = vshrl.u32 %v165, 7
    %v167 = vsub.s32 0, %v166
    %v168 = vrot.slane %v163, %v167
    %170 = vmatprep.subr.mxu0 0.0
    %171 = vmatpush1.msra.mxu0 %v162
    %172 = vmatprep.subr.mxu0 0.0
    %173 = vmatpush1.msra.mxu0 %v161
    %174 = vmatprep.subr.mxu0 0.0
    %175 = vmatpush1.msra.mxu0 %v160
    %176 = vmatprep.subr.mxu0 0.0
    %177 = vmatpush1.msra.mxu0 %v159
    %178 = vmatprep.subr.mxu0 0.0
    %179 = vmatpush1.msra.mxu0 %v158
    %180 = vmatprep.subr.mxu0 0.0
    %181 = vmatpush1.msra.mxu0 %v157
    %182 = vmatprep.subr.mxu0 0.0
    %183 = vmatpush1.msra.mxu0 %v156
    %184 = vmatprep.subr.mxu0 0.0
    %185 = vmatpush1.msra.mxu0 %v155
    %186 = vmatprep.subr.mxu0 0.0
    %187 = vmatpush1.msra.mxu0 %v154
    %188 = vmatprep.subr.mxu0 0.0
    %189 = vmatpush1.msra.mxu0 %v153
    %190 = vmatprep.subr.mxu0 0.0
    %191 = vmatpush1.msra.mxu0 %v152
    %192 = vmatprep.subr.mxu0 0.0
    %193 = vmatpush1.msra.mxu0 %v151
    %194 = vmatprep.subr.mxu0 0.0
    %195 = vmatpush1.msra.mxu0 %v150
    %196 = vmatprep.subr.mxu0 0.0
    %197 = vmatpush1.msra.mxu0 %v149
    %198 = vmatprep.subr.mxu0 0.0
    %199 = vmatpush1.msra.mxu0 %v148
    %200 = vmatprep.subr.mxu0 0.0
    %201 = vmatpush1.msra.mxu0 %v147
    %202 = vmatprep.subr.mxu0 0.0
    %203 = vmatpush2.msra.mxu0 0.0
    %204 = vmatprep.subr.mxu0 0.0
    %205 = vmatpush2.msra.mxu0 0.0
    %206 = vmatprep.subr.mxu0 0.0
    %207 = vmatpush2.msra.mxu0 0.0
    %208 = vmatprep.subr.mxu0 0.0
    %209 = vmatpush2.msra.mxu0 0.0
    %210 = vmatprep.subr.mxu0 0.0
    %211 = vmatpush2.msra.mxu0 0.0
    %212 = vmatprep.subr.mxu0 0.0
    %213 = vmatpush2.msra.mxu0 0.0
    %214 = vmatprep.subr.mxu0 0.0
    %215 = vmatpush2.msra.mxu0 0.0
    %216 = vmatprep.subr.mxu0 0.0
    %217 = vmatpush2.msra.mxu0 0.0
    %218 = vmatprep.subr.mxu0 0.0
    %219 = vmatpush2.msra.mxu0 0.0
    %220 = vmatprep.subr.mxu0 0.0
    %221 = vmatpush2.msra.mxu0 0.0
    %222 = vmatprep.subr.mxu0 0.0
    %223 = vmatpush2.msra.mxu0 0.0
    %224 = vmatprep.subr.mxu0 0.0
    %225 = vmatpush2.msra.mxu0 0.0
    %226 = vmatprep.subr.mxu0 0.0
    %227 = vmatpush2.msra.mxu0 0.0
    %228 = vmatprep.subr.mxu0 0.0
    %229 = vmatpush2.msra.mxu0 0.0
    %230 = vmatprep.subr.mxu0 0.0
    %231 = vmatpush2.msra.mxu0 0.0
    %232 = vmatprep.subr.mxu0 0.0
    %233 = vmatpush2.msra.mxu0 0.0
    %234 = vmatprep.mubr.f32.mxu0 0.0
    %235 = vmatmul.mubr.f32.gmra.mxu0 %v146
    %v236 = vpop.f32.mrf.mxu0
    %v237 = vadd.f32 %v168, %v236
    %v238 = vpop.f32.mrf.mxu0
    %239 = vdwg.mxu0
    %240 = vmax.xlane.f32.xlu0 %v237
    %v241 = vpop.xlane.xlu0 %240
    %v242 = vsub.f32 %v237, %v241
    %v243 = vmul.f32 %v242, 1.442695
    %v244 = vpow.pop %v243
    %245 = vadd.xlane.f32.xlu0 %v244
    %v246 = vpop.xlane.xlu0 %245
    %v247 = vrcp.pop %v246
    %v248 = vmul.f32 %v244, %v247
    %249 = vst [vmem:[#allocation8] sm:$0xff] %v248
    // Predicated region
    $region34: #{tpu_custom_call.1} parent=1 // pred_check
      _
    $region35: #{tpu_custom_call.1} parent=1 // pred_check_branch
      %251 = sbr.rel (0) target = $region37
    $region36: #{tpu_custom_call.1} parent=1 // pred_region
      %s253 = ssub.s32 128, 128
      %254 = vsyncadd [#allocation4], %s253
      %s256 = sshll.u32 [#allocation8], 4
      %s257 = int_to_ptr.vmem [resolvable:$true] %s256
      %259 = dma.vmem_to_hbm [thread:$0]  %s257, 128, %s5, [#allocation4]
    $region37: #{tpu_custom_call.1} parent=1 // pred_fallthru
      _
    // Predicated region
    $region38: #{tpu_custom_call.1} parent=1 // pred_check
      _
    $region39: #{tpu_custom_call.1} parent=1 // pred_check_branch
      %261 = sbr.rel (0) target = $region41
    $region40: #{tpu_custom_call.1} parent=1 // pred_region
      %262 = dma.done [#allocation4], 128
    $region41: #{tpu_custom_call.1} parent=1 // pred_fallthru
      _
    %263 = vsyncpa [#allocation3], 1
    %264 = vsyncpa [#allocation6], 1
    %265 = vsyncpa [#allocation4], 1

// kernel: tpu_custom_call.1
$region0: #{tpu_custom_call.1}
  #allocation0 [shape = 'u32[]', space=smem, size = 0x4, offset = 0x4, fixed_abs, tag = 'smem constant byte address 0x4 - core index']
  #allocation1 [shape = 'u32[144,128]{1,0:T(1,128)}', space=vmem, size = 0x12000, scoped, tag = 'internal scratch']
  %s0 = inlined_call_operand.hbm [shape: f32[8,32], index: 0, kind: input, shape index: {}]
  %s1 = inlined_call_operand.hbm [shape: f32[32,128], index: 1, kind: input, shape index: {}]
  %s2 = inlined_call_operand.vmem [shape: f32[1,128], index: 2, kind: input, shape index: {}]
  %s3 = inlined_call_operand.hbm [shape: f32[128,128], index: 3, kind: input, shape index: {}]
  %s4 = inlined_call_operand.vmem [shape: f32[1,128], index: 4, kind: input, shape index: {}]
  %s5 = inlined_call_operand.hbm [shape: f32[8,128], index: 5, kind: output, shape index: {}]
  %s6 = sld [smem:[#allocation0]]
  $region42: #{tpu_custom_call.1} parent=0
    _
  %s8 = ssub.s32 1, %s6
  %s9 = scalar_select 0, %s8, %s6
  $region1: #{tpu_custom_call.1} parent=0
    #allocation2 [shape = 'u8[4096]{0}', space=vmem, size = 0x1000, scoped, tag = 'input window, operand 0, single buffered']
    #allocation3 [shape = 's32[1]{0}', space=sflag, size = 0x4, scoped, tag = 'scoped memory for tpu_custom_call.1']
    #allocation4 [shape = 's32[1]{0}', space=sflag, size = 0x4, scoped, tag = 'scoped memory for tpu_custom_call.1']
    #allocation5 [shape = 'u8[16384]{0}', space=vmem, size = 0x4000, scoped, tag = 'input window, operand 1, single buffered']
    #allocation6 [shape = 's32[1]{0}', space=sflag, size = 0x4, scoped, tag = 'scoped memory for tpu_custom_call.1']
    #allocation7 [shape = 'u8[65536]{0}', space=vmem, size = 0x10000, scoped, tag = 'input window, operand 3, single buffered']
    #allocation8 [shape = 'u8[4096]{0}', space=vmem, size = 0x1000, scoped, tag = 'output window, operand 0, single buffered']
    %10 = vsyncpa [#allocation3], 0
    %11 = vsyncpa [#allocation6], 0
    %12 = vsyncpa [#allocation4], 0
    // Predicated region
    $region2: #{tpu_custom_call.1} parent=1 // pred_check
      _
    $region3: #{tpu_custom_call.1} parent=1 // pred_check_branch
      %14 = sbr.rel (0) target = $region5
    $region4: #{tpu_custom_call.1} parent=1 // pred_region
      %s16 = ssub.s32 128, 128
      %17 = vsyncadd [#allocation3], %s16
      %s19 = sshll.u32 [#allocation2], 4
      %s20 = int_to_ptr.vmem [resolvable:$true] %s19
      %22 = dma.hbm_to_vmem [thread:$0]  %s0, 128, %s20, [#allocation3]
    $region5: #{tpu_custom_call.1} parent=1 // pred_fallthru
      _
    // Predicated region
    $region6: #{tpu_custom_call.1} parent=1 // pred_check
      _
    $region7: #{tpu_custom_call.1} parent=1 // pred_check_branch
      %24 = sbr.rel (0) target = $region9
    $region8: #{tpu_custom_call.1} parent=1 // pred_region
      %s26 = ssub.s32 512, 512
      %27 = vsyncadd [#allocation6], %s26
      %s28 = sshll.u32 [#allocation5], 4
      %s29 = int_to_ptr.vmem [resolvable:$true] %s28
      %34 = dma.hbm_to_vmem [thread:$0]  %s1, 512, %s29, [#allocation6], 128, 128, 8
    $region9: #{tpu_custom_call.1} parent=1 // pred_fallthru
      _
    // Predicated region
    $region10: #{tpu_custom_call.1} parent=1 // pred_check
      _
    $region11: #{tpu_custom_call.1} parent=1 // pred_check_branch
      %36 = sbr.rel (0) target = $region13
    $region12: #{tpu_custom_call.1} parent=1 // pred_region
      _
    $region13: #{tpu_custom_call.1} parent=1 // pred_fallthru
      _
    // Predicated region
    $region14: #{tpu_custom_call.1} parent=1 // pred_check
      _
    $region15: #{tpu_custom_call.1} parent=1 // pred_check_branch
      %38 = sbr.rel (0) target = $region17
    $region16: #{tpu_custom_call.1} parent=1 // pred_region
      %s40 = ssub.s32 2048, 2048
      %41 = vsyncadd [#allocation6], %s40
      %s42 = sshll.u32 [#allocation7], 4
      %s43 = int_to_ptr.vmem [resolvable:$true] %s42
      %48 = dma.hbm_to_vmem [thread:$0]  %s3, 2048, %s43, [#allocation6], 128, 128, 8
    $region17: #{tpu_custom_call.1} parent=1 // pred_fallthru
      _
    // Predicated region
    $region18: #{tpu_custom_call.1} parent=1 // pred_check
      _
    $region19: #{tpu_custom_call.1} parent=1 // pred_check_branch
      %50 = sbr.rel (0) target = $region21
    $region20: #{tpu_custom_call.1} parent=1 // pred_region
      _
    $region21: #{tpu_custom_call.1} parent=1 // pred_fallthru
      _
    // Predicated region
    $region22: #{tpu_custom_call.1} parent=1 // pred_check
      _
    $region23: #{tpu_custom_call.1} parent=1 // pred_check_branch
      %52 = sbr.rel (0) target = $region25
    $region24: #{tpu_custom_call.1} parent=1 // pred_region
      %53 = dma.done [#allocation3], 128
    $region25: #{tpu_custom_call.1} parent=1 // pred_fallthru
      _
    // Predicated region
    $region26: #{tpu_custom_call.1} parent=1 // pred_check
      _
    $region27: #{tpu_custom_call.1} parent=1 // pred_check_branch
      %55 = sbr.rel (0) target = $region29
    $region28: #{tpu_custom_call.1} parent=1 // pred_region
      %56 = dma.done [#allocation6], 512
    $region29: #{tpu_custom_call.1} parent=1 // pred_fallthru
      _
    // Predicated region
    $region30: #{tpu_custom_call.1} parent=1 // pred_check
      _
    $region31: #{tpu_custom_call.1} parent=1 // pred_check_branch
      %58 = sbr.rel (0) target = $region33
    $region32: #{tpu_custom_call.1} parent=1 // pred_region
      %59 = dma.done [#allocation6], 2048
    $region33: #{tpu_custom_call.1} parent=1 // pred_fallthru
      _
    %v60 = vld [vmem:[#allocation2] sm:$0xff]
    %v61 = vld [vmem:[#allocation5] sm:$0xff]
    %v62 = vld [vmem:[#allocation5 + $0x8] sm:$0xff]
    %v63 = vld [vmem:[#allocation5 + $0x10] sm:$0xff]
    %v64 = vld [vmem:[#allocation5 + $0x18] sm:$0xff]
    %v65 = vld [vmem:[%s2] sm:$0x1]
    %v67 = vlaneseq
    %v68 = vshrl.u32 %v67, 7
    %v69 = vsub.s32 0, %v68
    %v70 = vrot.slane %v65, %v69
    %vm72 = vcmask 261120
    %v74 = vsel %vm72, %v60, 0
    %76 = vmatprep.subr.mxu0 0.0
    %77 = vmatpush1.msra.mxu0 0.0
    %78 = vmatprep.subr.mxu0 0.0
    %79 = vmatpush1.msra.mxu0 0.0
    %80 = vmatprep.subr.mxu0 0.0
    %81 = vmatpush1.msra.mxu0 0.0
    %82 = vmatprep.subr.mxu0 0.0
    %83 = vmatpush1.msra.mxu0 0.0
    %84 = vmatprep.subr.mxu0 0.0
    %85 = vmatpush1.msra.mxu0 0.0
    %86 = vmatprep.subr.mxu0 0.0
    %87 = vmatpush1.msra.mxu0 0.0
    %88 = vmatprep.subr.mxu0 0.0
    %89 = vmatpush1.msra.mxu0 0.0
    %90 = vmatprep.subr.mxu0 0.0
    %91 = vmatpush1.msra.mxu0 0.0
    %92 = vmatprep.subr.mxu0 0.0
    %93 = vmatpush1.msra.mxu0 0.0
    %94 = vmatprep.subr.mxu0 0.0
    %95 = vmatpush1.msra.mxu0 0.0
    %96 = vmatprep.subr.mxu0 0.0
    %97 = vmatpush1.msra.mxu0 0.0
    %98 = vmatprep.subr.mxu0 0.0
    %99 = vmatpush1.msra.mxu0 0.0
    %100 = vmatprep.subr.mxu0 0.0
    %101 = vmatpush1.msra.mxu0 %v64
    %102 = vmatprep.subr.mxu0 0.0
    %103 = vmatpush1.msra.mxu0 %v63
    %104 = vmatprep.subr.mxu0 0.0
    %105 = vmatpush1.msra.mxu0 %v62
    %106 = vmatprep.subr.mxu0 0.0
    %107 = vmatpush1.msra.mxu0 %v61
    %108 = vmatprep.subr.mxu0 0.0
    %109 = vmatpush2.msra.mxu0 0.0
    %110 = vmatprep.subr.mxu0 0.0
    %111 = vmatpush2.msra.mxu0 0.0
    %112 = vmatprep.subr.mxu0 0.0
    %113 = vmatpush2.msra.mxu0 0.0
    %114 = vmatprep.subr.mxu0 0.0
    %115 = vmatpush2.msra.mxu0 0.0
    %116 = vmatprep.subr.mxu0 0.0
    %117 = vmatpush2.msra.mxu0 0.0
    %118 = vmatprep.subr.mxu0 0.0
    %119 = vmatpush2.msra.mxu0 0.0
    %120 = vmatprep.subr.mxu0 0.0
    %121 = vmatpush2.msra.mxu0 0.0
    %122 = vmatprep.subr.mxu0 0.0
    %123 = vmatpush2.msra.mxu0 0.0
    %124 = vmatprep.subr.mxu0 0.0
    %125 = vmatpush2.msra.mxu0 0.0
    %126 = vmatprep.subr.mxu0 0.0
    %127 = vmatpush2.msra.mxu0 0.0
    %128 = vmatprep.subr.mxu0 0.0
    %129 = vmatpush2.msra.mxu0 0.0
    %130 = vmatprep.subr.mxu0 0.0
    %131 = vmatpush2.msra.mxu0 0.0
    %132 = vmatprep.subr.mxu0 0.0
    %133 = vmatpush2.msra.mxu0 0.0
    %134 = vmatprep.subr.mxu0 0.0
    %135 = vmatpush2.msra.mxu0 0.0
    %136 = vmatprep.subr.mxu0 0.0
    %137 = vmatpush2.msra.mxu0 0.0
    %138 = vmatprep.subr.mxu0 0.0
    %139 = vmatpush2.msra.mxu0 0.0
    %140 = vmatprep.mubr.f32.mxu0 0.0
    %141 = vmatmul.mubr.f32.gmra.mxu0 %v74
    %v142 = vpop.f32.mrf.mxu0
    %v143 = vadd.f32 %v70, %v142
    %v144 = vpop.f32.mrf.mxu0
    %145 = vdwg.mxu0
    %v146 = vmax.f32 %v143, 0.0
    %v147 = vld [vmem:[#allocation7] sm:$0xff]
    %v148 = vld [vmem:[#allocation7 + $0x8] sm:$0xff]
    %v149 = vld [vmem:[#allocation7 + $0x10] sm:$0xff]
    %v150 = vld [vmem:[#allocation7 + $0x18] sm:$0xff]
    %v151 = vld [vmem:[#allocation7 + $0x20] sm:$0xff]
    %v152 = vld [vmem:[#allocation7 + $0x28] sm:$0xff]
    %v153 = vld [vmem:[#allocation7 + $0x30] sm:$0xff]
    %v154 = vld [vmem:[#allocation7 + $0x38] sm:$0xff]
    %v155 = vld [vmem:[#allocation7 + $0x40] sm:$0xff]
    %v156 = vld [vmem:[#allocation7 + $0x48] sm:$0xff]
    %v157 = vld [vmem:[#allocation7 + $0x50] sm:$0xff]
    %v158 = vld [vmem:[#allocation7 + $0x58] sm:$0xff]
    %v159 = vld [vmem:[#allocation7 + $0x60] sm:$0xff]
    %v160 = vld [vmem:[#allocation7 + $0x68] sm:$0xff]
    %v161 = vld [vmem:[#allocation7 + $0x70] sm:$0xff]
    %v162 = vld [vmem:[#allocation7 + $0x78] sm:$0xff]
    %v163 = vld [vmem:[%s4] sm:$0x1]
    %v165 = vlaneseq
    %v166 = vshrl.u32 %v165, 7
    %v167 = vsub.s32 0, %v166
    %v168 = vrot.slane %v163, %v167
    %170 = vmatprep.subr.mxu0 0.0
    %171 = vmatpush1.msra.mxu0 %v162
    %172 = vmatprep.subr.mxu0 0.0
    %173 = vmatpush1.msra.mxu0 %v161
    %174 = vmatprep.subr.mxu0 0.0
    %175 = vmatpush1.msra.mxu0 %v160
    %176 = vmatprep.subr.mxu0 0.0
    %177 = vmatpush1.msra.mxu0 %v159
    %178 = vmatprep.subr.mxu0 0.0
    %179 = vmatpush1.msra.mxu0 %v158
    %180 = vmatprep.subr.mxu0 0.0
    %181 = vmatpush1.msra.mxu0 %v157
    %182 = vmatprep.subr.mxu0 0.0
    %183 = vmatpush1.msra.mxu0 %v156
    %184 = vmatprep.subr.mxu0 0.0
    %185 = vmatpush1.msra.mxu0 %v155
    %186 = vmatprep.subr.mxu0 0.0
    %187 = vmatpush1.msra.mxu0 %v154
    %188 = vmatprep.subr.mxu0 0.0
    %189 = vmatpush1.msra.mxu0 %v153
    %190 = vmatprep.subr.mxu0 0.0
    %191 = vmatpush1.msra.mxu0 %v152
    %192 = vmatprep.subr.mxu0 0.0
    %193 = vmatpush1.msra.mxu0 %v151
    %194 = vmatprep.subr.mxu0 0.0
    %195 = vmatpush1.msra.mxu0 %v150
    %196 = vmatprep.subr.mxu0 0.0
    %197 = vmatpush1.msra.mxu0 %v149
    %198 = vmatprep.subr.mxu0 0.0
    %199 = vmatpush1.msra.mxu0 %v148
    %200 = vmatprep.subr.mxu0 0.0
    %201 = vmatpush1.msra.mxu0 %v147
    %202 = vmatprep.subr.mxu0 0.0
    %203 = vmatpush2.msra.mxu0 0.0
    %204 = vmatprep.subr.mxu0 0.0
    %205 = vmatpush2.msra.mxu0 0.0
    %206 = vmatprep.subr.mxu0 0.0
    %207 = vmatpush2.msra.mxu0 0.0
    %208 = vmatprep.subr.mxu0 0.0
    %209 = vmatpush2.msra.mxu0 0.0
    %210 = vmatprep.subr.mxu0 0.0
    %211 = vmatpush2.msra.mxu0 0.0
    %212 = vmatprep.subr.mxu0 0.0
    %213 = vmatpush2.msra.mxu0 0.0
    %214 = vmatprep.subr.mxu0 0.0
    %215 = vmatpush2.msra.mxu0 0.0
    %216 = vmatprep.subr.mxu0 0.0
    %217 = vmatpush2.msra.mxu0 0.0
    %218 = vmatprep.subr.mxu0 0.0
    %219 = vmatpush2.msra.mxu0 0.0
    %220 = vmatprep.subr.mxu0 0.0
    %221 = vmatpush2.msra.mxu0 0.0
    %222 = vmatprep.subr.mxu0 0.0
    %223 = vmatpush2.msra.mxu0 0.0
    %224 = vmatprep.subr.mxu0 0.0
    %225 = vmatpush2.msra.mxu0 0.0
    %226 = vmatprep.subr.mxu0 0.0
    %227 = vmatpush2.msra.mxu0 0.0
    %228 = vmatprep.subr.mxu0 0.0
    %229 = vmatpush2.msra.mxu0 0.0
    %230 = vmatprep.subr.mxu0 0.0
    %231 = vmatpush2.msra.mxu0 0.0
    %232 = vmatprep.subr.mxu0 0.0
    %233 = vmatpush2.msra.mxu0 0.0
    %234 = vmatprep.mubr.f32.mxu0 0.0
    %235 = vmatmul.mubr.f32.gmra.mxu0 %v146
    %v236 = vpop.f32.mrf.mxu0
    %v237 = vadd.f32 %v168, %v236
    %v238 = vpop.f32.mrf.mxu0
    %239 = vdwg.mxu0
    %240 = vmax.xlane.f32.xlu0 %v237
    %v241 = vpop.xlane.xlu0 %240
    %v242 = vsub.f32 %v237, %v241
    %v243 = vmul.f32 %v242, 1.442695
    %v244 = vpow.pop %v243
    %245 = vadd.xlane.f32.xlu0 %v244
    %v246 = vpop.xlane.xlu0 %245
    %v247 = vrcp.pop %v246
    %v248 = vmul.f32 %v244, %v247
    %249 = vst [vmem:[#allocation8] sm:$0xff] %v248
    // Predicated region
    $region34: #{tpu_custom_call.1} parent=1 // pred_check
      _
    $region35: #{tpu_custom_call.1} parent=1 // pred_check_branch
      %251 = sbr.rel (0) target = $region37
    $region36: #{tpu_custom_call.1} parent=1 // pred_region
      %s253 = ssub.s32 128, 128
      %254 = vsyncadd [#allocation4], %s253
      %s256 = sshll.u32 [#allocation8], 4
      %s257 = int_to_ptr.vmem [resolvable:$true] %s256
      %259 = dma.vmem_to_hbm [thread:$0]  %s257, 128, %s5, [#allocation4]
    $region37: #{tpu_custom_call.1} parent=1 // pred_fallthru
      _
    // Predicated region
    $region38: #{tpu_custom_call.1} parent=1 // pred_check
      _
    $region39: #{tpu_custom_call.1} parent=1 // pred_check_branch
      %261 = sbr.rel (0) target = $region41
    $region40: #{tpu_custom_call.1} parent=1 // pred_region
      %262 = dma.done [#allocation4], 128
    $region41: #{tpu_custom_call.1} parent=1 // pred_fallthru
      _
    %263 = vsyncpa [#allocation3], 1
    %264 = vsyncpa [#allocation6], 1
    %265 = vsyncpa [#allocation4], 1

</llo_original>
